<compile_context>
chip_gen: v7x
topology: tpu7x:2x2x1
jax: 0.10.0
libtpu: 0.0.40
codegen_flags: <defaults>
</compile_context>

<pallas_src>
import functools

import jax
import jax.numpy as jnp
from jax.experimental import pallas as pl
from jax.experimental.pallas import tpu as pltpu


# ----------------------- generation-aware scoped-VMEM budget -----------------------

_VMEM_LIMIT_CACHE = None


def _vmem_limit_bytes():
    """Generous on 128 MiB parts (v5e/v6e), conservative cap that still fits v7x (64 MiB)."""
    global _VMEM_LIMIT_CACHE
    if _VMEM_LIMIT_CACHE is None:
        limit = 48 * 1024 * 1024                      # safe on every generation
        try:
            info = pltpu.get_tpu_info()
            cap = int(getattr(info, "vmem_capacity_bytes", 0) or 0)
            if cap:
                limit = min((cap * 3) // 4, 96 * 1024 * 1024)
        except Exception:
            pass
        _VMEM_LIMIT_CACHE = limit
    return _VMEM_LIMIT_CACHE


# ----------------------- tiled linear: y = x @ w_t + b -----------------------------

def _linear_kernel(x_ref, w_ref, b_ref, o_ref, acc_ref, *, compute_dtype):
    # x:(tm,tk), w:(tk,tn) pre-transposed -> canonical (M,K)x(K,N) contraction (no per-step
    # XLU weight transpose), b:(1,tn), acc:(tm,tn) f32 scratch carried across the K axis.
    @pl.when(pl.program_id(2) == 0)
    def _init():
        acc_ref[...] = jnp.zeros_like(acc_ref)

    acc_ref[...] += jnp.dot(x_ref[...].astype(compute_dtype),
                            w_ref[...].astype(compute_dtype),
                            preferred_element_type=jnp.float32)

    @pl.when(pl.program_id(2) == pl.num_programs(2) - 1)
    def _finalize():
        o_ref[...] = (acc_ref[...] + b_ref[...].astype(jnp.float32)).astype(o_ref.dtype)


def _fit_tile(dim, pref, align):
    """Largest tile <= pref that evenly divides dim, preferring multiples of `align`.
    Avoids the old 'fall back to one full-axis block' VMEM trap on large non-divisible dims."""
    if dim <= pref:
        return dim
    cap = min(pref, dim)
    for cand in range((cap // align) * align, 0, -align):
        if dim % cand == 0:
            return cand
    for cand in range(cap, 0, -1):
        if dim % cand == 0:
            return cand
    return dim


def pallas_linear(x, w_t, b, *, tm=256, tn=256, tk=512, compute_dtype=jnp.bfloat16):
    """y = x @ w_t + b with w_t already (K, N) (PyTorch weight transposed at param prep)."""
    M, K = x.shape
    K2, N = w_t.shape
    assert K == K2
    tm = _fit_tile(M, tm, 8)
    tn = _fit_tile(N, tn, 128)
    tk = _fit_tile(K, tk, 128)
    grid = (M // tm, N // tn, K // tk)
    kernel = functools.partial(_linear_kernel, compute_dtype=compute_dtype)
    return pl.pallas_call(
        kernel,
        grid_spec=pltpu.PrefetchScalarGridSpec(
            num_scalar_prefetch=0,
            grid=grid,
            in_specs=[
                pl.BlockSpec((tm, tk), lambda i, j, k: (i, k)),   # x
                pl.BlockSpec((tk, tn), lambda i, j, k: (k, j)),   # w_t (already (K, N))
                pl.BlockSpec((1, tn), lambda i, j, k: (0, j)),    # bias
            ],
            out_specs=pl.BlockSpec((tm, tn), lambda i, j, k: (i, j)),
            scratch_shapes=[pltpu.VMEM((tm, tn), jnp.float32)],
        ),
        out_shape=jax.ShapeDtypeStruct((M, N), x.dtype),
        compiler_params=pltpu.CompilerParams(
            dimension_semantics=("parallel", "parallel", "arbitrary"),
            vmem_limit_bytes=_vmem_limit_bytes(),
        ),
    )(x, w_t, b.reshape(1, N))


# ------------------- fused multi-head attention (per batch) ------------------------

def _mha_kernel(qkv_ref, o_ref, p_ref, *, num_heads, head_dim, embed_dim, scale,
                compute_dtype, approx_recip):
    # One batch element per (parallel) grid step. Heads are a batch dim of the two
    # dot_generals: no Python head loop, no head_out list, no lane concat.
    H, Dh, E = num_heads, head_dim, embed_dim
    qkv = qkv_ref[0]                                          # (T, 3E) f32
    T = qkv.shape[0]
    q = (qkv[:, 0 * E:1 * E] * scale).astype(compute_dtype)   # scale folded into q (T*E muls)
    k = qkv[:, 1 * E:2 * E].astype(compute_dtype)
    v = qkv[:, 2 * E:3 * E].astype(compute_dtype)
    qh = q.reshape(T, H, Dh)
    kh = k.reshape(T, H, Dh)
    vh = v.reshape(T, H, Dh)

    # scores (H, T, S); softmax kept in f32.
    s = jnp.einsum("qhd,khd->hqk", qh, kh, preferred_element_type=jnp.float32)
    m = jnp.max(s, axis=-1, keepdims=True)
    e = jnp.exp(s - m)
    l = jnp.sum(e, axis=-1, keepdims=True)
    p = e * pl.reciprocal(l, approx=approx_recip)             # approx=True -> EUP vrcp
    p_ref[0] = p.astype(p_ref.dtype)                          # single (H,T,S) f32 store

    o = jnp.einsum("hqk,khd->qhd", p.astype(compute_dtype), vh,
                   preferred_element_type=jnp.float32)        # (T, H, Dh)
    o_ref[0] = o.reshape(T, E).astype(o_ref.dtype)


def pallas_mha(qkv_bt3e, num_heads, *, scale, compute_dtype=jnp.bfloat16, approx_recip=True):
    """qkv_bt3e:(B,T,3E) -> (attn:(B,T,E), probs:(B,H,T,T) float32)."""
    B, T, threeE = qkv_bt3e.shape
    E = threeE // 3
    H = num_heads
    Dh = E // H
    kernel = functools.partial(_mha_kernel, num_heads=H, head_dim=Dh, embed_dim=E,
                               scale=scale, compute_dtype=compute_dtype,
                               approx_recip=approx_recip)
    return pl.pallas_call(
        kernel,
        grid=(B,),
        in_specs=[pl.BlockSpec((1, T, threeE), lambda b: (b, 0, 0))],
        out_specs=(
            pl.BlockSpec((1, T, E), lambda b: (b, 0, 0)),
            pl.BlockSpec((1, H, T, T), lambda b: (b, 0, 0, 0)),
        ),
        out_shape=(
            jax.ShapeDtypeStruct((B, T, E), qkv_bt3e.dtype),
            jax.ShapeDtypeStruct((B, H, T, T), jnp.float32),
        ),
        compiler_params=pltpu.CompilerParams(
            dimension_semantics=("parallel",),
            vmem_limit_bytes=_vmem_limit_bytes(),
        ),
    )(qkv_bt3e)


# ----------------------------- module wrapper ---------------------------------------

def prepare_params(params, weights_dtype=jnp.float32):
    """One-time (outside the hot path) weight relayout to (K, N); biases stay f32."""
    return {
        "in_w_t": jnp.asarray(params["in_w"]).T.astype(weights_dtype),    # (E, 3E)
        "in_b": jnp.asarray(params["in_b"], jnp.float32),
        "out_w_t": jnp.asarray(params["out_w"]).T.astype(weights_dtype),  # (E, E)
        "out_b": jnp.asarray(params["out_b"], jnp.float32),
    }


def multihead_attention_c(g, prepared, num_heads, *, compute_dtype=jnp.bfloat16,
                          approx_recip=True):
    """Self-attention branch, mode='control', eval mode (dropout is identity).

    Returns (g_attn, sample, attn_data) like the PyTorch module.
    """
    T, B, E = g.shape
    H = num_heads
    Dh = E // H
    scale = Dh ** -0.5

    g_bt = jnp.transpose(g, (1, 0, 2)).reshape(B * T, E)                    # (B*T, E)
    qkv = pallas_linear(g_bt, prepared["in_w_t"], prepared["in_b"],
                        compute_dtype=compute_dtype)                        # (B*T, 3E)
    qkv = qkv.reshape(B, T, 3 * E)                                          # free reshape

    attn_bte, probs = pallas_mha(qkv, H, scale=scale, compute_dtype=compute_dtype,
                                 approx_recip=approx_recip)                 # (B,T,E),(B,H,T,T)

    out_bt = pallas_linear(attn_bte.reshape(B * T, E), prepared["out_w_t"],
                           prepared["out_b"], compute_dtype=compute_dtype)  # (B*T, E)
    out = out_bt.reshape(B, T, E).transpose(1, 0, 2)                        # (T, B, E)

    sample = probs.reshape(B * H, T, T)                                     # mode == 'control'
    attn_data = {"g_attn": probs, "sample": probs}
    return out, sample, attn_data


# ----------------------------- reference (plain JAX) --------------------------------

def reference(g, params, H):
    T, B, E = g.shape
    Dh = E // H
    hp = jax.lax.Precision.HIGHEST
    qkv = jnp.einsum("tbe,ne->tbn", g, params["in_w"], precision=hp) + params["in_b"]
    q, k, v = jnp.split(qkv, 3, axis=-1)
    q = q * (Dh ** -0.5)

    def heads(t):
        return t.reshape(T, B * H, Dh).transpose(1, 0, 2)

    qh, kh, vh = heads(q), heads(k), heads(v)
    w = jnp.einsum("btd,bsd->bts", qh, kh, precision=hp)
    p = jax.nn.softmax(w, axis=-1)
    a = jnp.einsum("bts,bsd->btd", p, vh, precision=hp)
    a = a.transpose(1, 0, 2).reshape(T, B, E)
    out = jnp.einsum("tbe,ne->tbn", a, params["out_w"], precision=hp) + params["out_b"]
    return out, p


# ----------------------------- parameter init ---------------------------------------

def xavier_uniform(key, shape):
    fan_out, fan_in = shape
    limit = (6.0 / (fan_in + fan_out)) ** 0.5
    return jax.random.uniform(key, shape, jnp.float32, -limit, limit)


if __name__ == "__main__":
    T, B, E, H = 8, 2, 32, 4     # seq=8, batch=2, embed=32, heads=4 (head_dim=8)
    key = jax.random.PRNGKey(0)
    k1, k2, k3 = jax.random.split(key, 3)

    params = {
        "in_w": xavier_uniform(k1, (3 * E, E)),     # g_in_proj_weight  (3E, E)
        "in_b": jnp.zeros((3 * E,), jnp.float32),   # g_in_proj_bias (init 0)
        "out_w": xavier_uniform(k2, (E, E)),        # g_out_proj.weight
        "out_b": jnp.zeros((E,), jnp.float32),      # g_out_proj.bias (init 0)
    }
    g = jax.random.normal(k3, (T, B, E), jnp.float32)

    ref_out, ref_p = reference(g, params, H)

    # --- verification path: f32 MXU operands, f32 weights, exact reciprocal ---
    prepared_f32 = prepare_params(params, weights_dtype=jnp.float32)
    out, sample, attn_data = multihead_attention_c(
        g, prepared_f32, H, compute_dtype=jnp.float32, approx_recip=False)
    jax.block_until_ready((out, sample, attn_data["g_attn"]))
    assert out.shape == (T, B, E)
    assert sample.shape == (B * H, T, T)
    assert attn_data["g_attn"].shape == (B, H, T, T)
    assert jnp.allclose(out, ref_out, atol=1e-4, rtol=1e-4)
    assert jnp.allclose(sample, ref_p, atol=1e-5, rtol=1e-5)

    # --- fast path (default): bf16 MXU operands + bf16-stored weights, EUP reciprocal ---
    prepared_bf16 = prepare_params(params, weights_dtype=jnp.bfloat16)
    out_bf, sample_bf, _ = multihead_attention_c(g, prepared_bf16, H)
    jax.block_until_ready((out_bf, sample_bf))
    assert jnp.allclose(out_bf, ref_out, atol=5e-2, rtol=5e-2)
    assert jnp.allclose(sample_bf, ref_p, atol=5e-2, rtol=5e-2)

    print("KERNEL_OK")
</pallas_src>

<mosaic_0001>
module attributes {stable_mosaic.version = 11 : i64} {
  func.func @_linear_kernel(%arg0: i32, %arg1: i32, %arg2: i32, %arg3: memref<16x32xf32, #tpu.memory_space<vmem>>, %arg4: memref<32x96xf32, #tpu.memory_space<vmem>>, %arg5: memref<1x96xf32, #tpu.memory_space<vmem>>, %arg6: memref<16x96xf32, #tpu.memory_space<vmem>>, %arg7: memref<16x96xf32, #tpu.memory_space<vmem>>) attributes {dimension_semantics = [#tpu.dimension_semantics<parallel>, #tpu.dimension_semantics<parallel>, #tpu.dimension_semantics<arbitrary>], iteration_bounds = array<i64: 1, 1, 1>, scalar_prefetch = 0 : i64, scratch_operands = 1 : i64, tpu.core_type = #tpu.core_type<tc>, window_params = [{transform_indices = @transform_0, window_bounds = array<i64: 16, 32>}, {transform_indices = @transform_1, window_bounds = array<i64: 32, 96>}, {transform_indices = @transform_2, window_bounds = array<i64: 1, 96>}, {transform_indices = @transform_3, window_bounds = array<i64: 16, 96>}]} {
    %c0_i32 = arith.constant 0 : i32
    %0 = arith.cmpi eq, %arg2, %c0_i32 : i32
    %1 = arith.extui %0 : i1 to i32
    %c0_i32_0 = arith.constant 0 : i32
    %2 = arith.cmpi ne, %1, %c0_i32_0 : i32
    scf.if %2 {
      %cst_10 = arith.constant 0.000000e+00 : f32
      %12 = vector.broadcast %cst_10 : f32 to vector<16x96xf32>
      %c0_11 = arith.constant 0 : index
      %c0_12 = arith.constant 0 : index
      %13 = vector.load %arg7[%c0_11, %c0_12] : memref<16x96xf32, #tpu.memory_space<vmem>>, vector<16x96xf32>
      tpu.vector_store %arg7[%c0_11, %c0_12], %12 {strides = array<i32>} : memref<16x96xf32, #tpu.memory_space<vmem>>, vector<16x96xf32>,
    } else {
    }
    %c0 = arith.constant 0 : index
    %c0_1 = arith.constant 0 : index
    %3 = vector.load %arg7[%c0, %c0_1] : memref<16x96xf32, #tpu.memory_space<vmem>>, vector<16x96xf32>
    %c0_2 = arith.constant 0 : index
    %c0_3 = arith.constant 0 : index
    %4 = vector.load %arg3[%c0_2, %c0_3] : memref<16x32xf32, #tpu.memory_space<vmem>>, vector<16x32xf32>
    %c0_4 = arith.constant 0 : index
    %c0_5 = arith.constant 0 : index
    %5 = vector.load %arg4[%c0_4, %c0_5] : memref<32x96xf32, #tpu.memory_space<vmem>>, vector<32x96xf32>
    %cst = arith.constant dense<0.000000e+00> : vector<16x96xf32>
    %6 = tpu.matmul %4, %5, %cst {dimension_numbers = #tpu.dot_dimension_numbers<[1], [0], [0], [1], [0, 0, 1, 1], [], []>} : vector<16x32xf32>, vector<32x96xf32>, vector<16x96xf32> -> vector<16x96xf32>
    %7 = arith.addf %3, %6 : vector<16x96xf32>
    %c0_6 = arith.constant 0 : index
    %c0_7 = arith.constant 0 : index
    %8 = vector.load %arg7[%c0_6, %c0_7] : memref<16x96xf32, #tpu.memory_space<vmem>>, vector<16x96xf32>
    tpu.vector_store %arg7[%c0_6, %c0_7], %7 {strides = array<i32>} : memref<16x96xf32, #tpu.memory_space<vmem>>, vector<16x96xf32>,
    %c0_i32_8 = arith.constant 0 : i32
    %9 = arith.cmpi eq, %arg2, %c0_i32_8 : i32
    %10 = arith.extui %9 : i1 to i32
    %c0_i32_9 = arith.constant 0 : i32
    %11 = arith.cmpi ne, %10, %c0_i32_9 : i32
    scf.if %11 {
      %c0_10 = arith.constant 0 : index
      %c0_11 = arith.constant 0 : index
      %12 = vector.load %arg7[%c0_10, %c0_11] : memref<16x96xf32, #tpu.memory_space<vmem>>, vector<16x96xf32>
      %c0_12 = arith.constant 0 : index
      %c0_13 = arith.constant 0 : index
      %13 = vector.load %arg5[%c0_12, %c0_13] : memref<1x96xf32, #tpu.memory_space<vmem>>, vector<1x96xf32>
      %14 = vector.broadcast %13 : vector<1x96xf32> to vector<16x96xf32>
      %15 = arith.addf %12, %14 : vector<16x96xf32>
      %c0_14 = arith.constant 0 : index
      %c0_15 = arith.constant 0 : index
      %16 = vector.load %arg6[%c0_14, %c0_15] : memref<16x96xf32, #tpu.memory_space<vmem>>, vector<16x96xf32>
      tpu.vector_store %arg6[%c0_14, %c0_15], %15 {strides = array<i32>} : memref<16x96xf32, #tpu.memory_space<vmem>>, vector<16x96xf32>,
    } else {
    }
    return
  }
  func.func @transform_0(%arg0: i32, %arg1: i32, %arg2: i32) -> (i32, i32) {
    %c0_i32 = arith.constant 0 : i32
    return %arg0, %arg2 : i32, i32
  }
  func.func @transform_1(%arg0: i32, %arg1: i32, %arg2: i32) -> (i32, i32) {
    %c0_i32 = arith.constant 0 : i32
    return %arg2, %arg1 : i32, i32
  }
  func.func @transform_2(%arg0: i32, %arg1: i32, %arg2: i32) -> (i32, i32) {
    %c0_i32 = arith.constant 0 : i32
    %c0_i32_0 = arith.constant 0 : i32
    return %c0_i32, %arg1 : i32, i32
  }
  func.func @transform_3(%arg0: i32, %arg1: i32, %arg2: i32) -> (i32, i32) {
    %c0_i32 = arith.constant 0 : i32
    return %arg0, %arg1 : i32, i32
  }
}

</mosaic_0001>

<llo_original>
// kernel: tpu_custom_call.1
$region0: #{tpu_custom_call.1}
  #allocation0 [shape = 'u32[]', space=smem, size = 0x4, offset = 0x4, fixed_abs, tag = 'smem constant byte address 0x4 - core index']
  #allocation1 [shape = 'u32[144,128]{1,0:T(1,128)}', space=vmem, size = 0x12000, scoped, tag = 'internal scratch']
  #allocation2 [shape = 'f32[16,96]{1,0:T(8,128)}', space=vmem, size = 0x2000, scoped, tag = 'scratch operand']
  %s0 = inlined_call_operand.hbm [shape: f32[16,32], index: 0, kind: input, shape index: {}]
  %s1 = inlined_call_operand.hbm [shape: f32[32,96], index: 1, kind: input, shape index: {}]
  %s2 = inlined_call_operand.vmem [shape: f32[1,96], index: 2, kind: input, shape index: {}]
  %s3 = inlined_call_operand.hbm [shape: f32[16,96], index: 3, kind: output, shape index: {}]
  %s4 = sld [smem:[#allocation0]]
  $region38: #{tpu_custom_call.1} parent=0
    _
  %s6 = ssub.s32 1, %s4
  %s7 = scalar_select 0, %s6, %s4
  $region1: #{tpu_custom_call.1} parent=0
    #allocation3 [shape = 'u8[8192]{0}', space=vmem, size = 0x2000, scoped, tag = 'input window, operand 0, single buffered']
    #allocation4 [shape = 's32[1]{0}', space=sflag, size = 0x4, scoped, tag = 'scoped memory for tpu_custom_call.1']
    #allocation5 [shape = 's32[1]{0}', space=sflag, size = 0x4, scoped, tag = 'scoped memory for tpu_custom_call.1']
    #allocation6 [shape = 'u8[16384]{0}', space=vmem, size = 0x4000, scoped, tag = 'input window, operand 1, single buffered']
    #allocation7 [shape = 's32[1]{0}', space=sflag, size = 0x4, scoped, tag = 'scoped memory for tpu_custom_call.1']
    #allocation8 [shape = 'u8[8192]{0}', space=vmem, size = 0x2000, scoped, tag = 'output window, operand 0, single buffered']
    %8 = vsyncpa [#allocation4], 0
    %9 = vsyncpa [#allocation7], 0
    %10 = vsyncpa [#allocation5], 0
    // Predicated region
    $region2: #{tpu_custom_call.1} parent=1 // pred_check
      _
    $region3: #{tpu_custom_call.1} parent=1 // pred_check_branch
      %12 = sbr.rel (0) target = $region5
    $region4: #{tpu_custom_call.1} parent=1 // pred_region
      %s14 = ssub.s32 256, 256
      %15 = vsyncadd [#allocation4], %s14
      %s16 = sshll.u32 [#allocation3], 4
      %s17 = int_to_ptr.vmem [resolvable:$true] %s16
      %22 = dma.hbm_to_vmem [thread:$0]  %s0, 256, %s17, [#allocation4], 128, 128, 8
    $region5: #{tpu_custom_call.1} parent=1 // pred_fallthru
      _
    // Predicated region
    $region6: #{tpu_custom_call.1} parent=1 // pred_check
      _
    $region7: #{tpu_custom_call.1} parent=1 // pred_check_branch
      %24 = sbr.rel (0) target = $region9
    $region8: #{tpu_custom_call.1} parent=1 // pred_region
      %s26 = ssub.s32 512, 512
      %27 = vsyncadd [#allocation7], %s26
      %s28 = sshll.u32 [#allocation6], 4
      %s29 = int_to_ptr.vmem [resolvable:$true] %s28
      %34 = dma.hbm_to_vmem [thread:$0]  %s1, 512, %s29, [#allocation7], 128, 128, 8
    $region9: #{tpu_custom_call.1} parent=1 // pred_fallthru
      _
    // Predicated region
    $region10: #{tpu_custom_call.1} parent=1 // pred_check
      _
    $region11: #{tpu_custom_call.1} parent=1 // pred_check_branch
      %36 = sbr.rel (0) target = $region13
    $region12: #{tpu_custom_call.1} parent=1 // pred_region
      _
    $region13: #{tpu_custom_call.1} parent=1 // pred_fallthru
      _
    // Predicated region
    $region14: #{tpu_custom_call.1} parent=1 // pred_check
      _
    $region15: #{tpu_custom_call.1} parent=1 // pred_check_branch
      %38 = sbr.rel (0) target = $region17
    $region16: #{tpu_custom_call.1} parent=1 // pred_region
      %39 = dma.done [#allocation4], 256
    $region17: #{tpu_custom_call.1} parent=1 // pred_fallthru
      _
    // Predicated region
    $region18: #{tpu_custom_call.1} parent=1 // pred_check
      _
    $region19: #{tpu_custom_call.1} parent=1 // pred_check_branch
      %41 = sbr.rel (0) target = $region21
    $region20: #{tpu_custom_call.1} parent=1 // pred_region
      %42 = dma.done [#allocation7], 512
    $region21: #{tpu_custom_call.1} parent=1 // pred_fallthru
      _
    %p43 = scmp.eq.s32.totalorder 0, 0
    // Predicated region
    $region22: #{tpu_custom_call.1} parent=1 // pred_check
      %p44 = pneg %p43
    $region23: #{tpu_custom_call.1} parent=1 // pred_check_branch
      %46 = sbr.rel (%p44) target = $region25
    $region24: #{tpu_custom_call.1} parent=1 // pred_region
      %vm47 = vcmask 785408
      %48 = vst.msk [vmem:[#allocation2] sm:$0xff] %vm47, 0.0
      %49 = vst.msk [vmem:[#allocation2 + $0x8] sm:$0xff] %vm47, 0.0
    $region25: #{tpu_custom_call.1} parent=1 // pred_fallthru
      _
    %v50 = vld [vmem:[#allocation2] sm:$0xff]
    %v51 = vld [vmem:[#allocation2 + $0x8] sm:$0xff]
    %v52 = vld [vmem:[#allocation3] sm:$0xff]
    %v53 = vld [vmem:[#allocation3 + $0x8] sm:$0xff]
    %v54 = vld [vmem:[#allocation6] sm:$0xff]
    %v55 = vld [vmem:[#allocation6 + $0x8] sm:$0xff]
    %v56 = vld [vmem:[#allocation6 + $0x10] sm:$0xff]
    %v57 = vld [vmem:[#allocation6 + $0x18] sm:$0xff]
    %vm58 = vcmask 261120
    %v60 = vsel %vm58, %v52, 0
    %v63 = vsel %vm58, %v53, 0
    %65 = vmatprep.subr.mxu0 0.0
    %66 = vmatpush1.msra.mxu0 %v54
    %67 = vmatprep.subr.mxu0 0.0
    %68 = vmatpush1.msra.mxu0 %v55
    %69 = vmatprep.subr.mxu0 0.0
    %70 = vmatpush1.msra.mxu0 %v56
    %71 = vmatprep.subr.mxu0 0.0
    %72 = vmatpush1.msra.mxu0 %v57
    %73 = vmatprep.subr.mxu0 0.0
    %74 = vmatpush1.msra.mxu0 0.0
    %75 = vmatprep.subr.mxu0 0.0
    %76 = vmatpush1.msra.mxu0 0.0
    %77 = vmatprep.subr.mxu0 0.0
    %78 = vmatpush1.msra.mxu0 0.0
    %79 = vmatprep.subr.mxu0 0.0
    %80 = vmatpush1.msra.mxu0 0.0
    %81 = vmatprep.subr.mxu0 0.0
    %82 = vmatpush1.msra.mxu0 0.0
    %83 = vmatprep.subr.mxu0 0.0
    %84 = vmatpush1.msra.mxu0 0.0
    %85 = vmatprep.subr.mxu0 0.0
    %86 = vmatpush1.msra.mxu0 0.0
    %87 = vmatprep.subr.mxu0 0.0
    %88 = vmatpush1.msra.mxu0 0.0
    %89 = vmatprep.subr.mxu0 0.0
    %90 = vmatpush1.msra.mxu0 0.0
    %91 = vmatprep.subr.mxu0 0.0
    %92 = vmatpush1.msra.mxu0 0.0
    %93 = vmatprep.subr.mxu0 0.0
    %94 = vmatpush1.msra.mxu0 0.0
    %95 = vmatprep.subr.mxu0 0.0
    %96 = vmatpush1.msra.mxu0 0.0
    %97 = vmatprep.subr.mxu0 0.0
    %98 = vmatpush1.msra.mxu0 0.0
    %99 = vmatprep.subr.mxu0 0.0
    %100 = vmatpush1.msra.mxu0 0.0
    %101 = vmatprep.subr.mxu0 0.0
    %102 = vmatpush1.msra.mxu0 0.0
    %103 = vmatprep.subr.mxu0 0.0
    %104 = vmatpush1.msra.mxu0 0.0
    %105 = vmatprep.subr.mxu0 0.0
    %106 = vmatpush1.msra.mxu0 0.0
    %107 = vmatprep.subr.mxu0 0.0
    %108 = vmatpush1.msra.mxu0 0.0
    %109 = vmatprep.subr.mxu0 0.0
    %110 = vmatpush1.msra.mxu0 0.0
    %111 = vmatprep.subr.mxu0 0.0
    %112 = vmatpush1.msra.mxu0 0.0
    %113 = vmatprep.subr.mxu0 0.0
    %114 = vmatpush1.msra.mxu0 0.0
    %115 = vmatprep.subr.mxu0 0.0
    %116 = vmatpush1.msra.mxu0 0.0
    %117 = vmatprep.subr.mxu0 0.0
    %118 = vmatpush1.msra.mxu0 0.0
    %119 = vmatprep.subr.mxu0 0.0
    %120 = vmatpush1.msra.mxu0 0.0
    %121 = vmatprep.subr.mxu0 0.0
    %122 = vmatpush1.msra.mxu0 0.0
    %123 = vmatprep.subr.mxu0 0.0
    %124 = vmatpush1.msra.mxu0 0.0
    %125 = vmatprep.subr.mxu0 0.0
    %126 = vmatpush1.msra.mxu0 0.0
    %127 = vmatprep.subr.mxu0 0.0
    %128 = vmatpush1.msra.mxu0 0.0
    %129 = vmatprep.mubr.f32.mxu0 0.0
    %130 = vmatmul.mubr.f32.gmra.mrb[0].mxu0 %v60
    %v131 = vpop.f32.mrb[0].mxu0
    %v132 = vadd.f32 0.0, %v131
    %v133 = vpop.f32.mrb[0].mxu0
    %134 = vmatprep.mubr.f32.mxu0 0.0
    %135 = vmatmul.mubr.f32.gmra.mrb[0].mxu0 %v63
    %v136 = vpop.f32.mrb[0].mxu0
    %v137 = vadd.f32 0.0, %v136
    %v138 = vpop.f32.mrb[0].mxu0
    %139 = vdwg.mxu0
    %v140 = vadd.f32 %v50, %v132
    %v141 = vadd.f32 %v51, %v137
    %vm142 = vcmask 785408
    %143 = vst.msk [vmem:[#allocation2] sm:$0xff] %vm142, %v140
    %144 = vst.msk [vmem:[#allocation2 + $0x8] sm:$0xff] %vm142, %v141
    // Predicated region
    $region26: #{tpu_custom_call.1} parent=1 // pred_check
      %p145 = pneg %p43
    $region27: #{tpu_custom_call.1} parent=1 // pred_check_branch
      %147 = sbr.rel (%p145) target = $region29
    $region28: #{tpu_custom_call.1} parent=1 // pred_region
      %v148 = vld [vmem:[#allocation2] sm:$0xff]
      %v149 = vld [vmem:[#allocation2 + $0x8] sm:$0xff]
      %v150 = vld [vmem:[%s2] sm:$0x1]
      %v152 = vlaneseq
      %v153 = vshrl.u32 %v152, 7
      %v154 = vsub.s32 0, %v153
      %v155 = vrot.slane %v150, %v154
      %v157 = vadd.f32 %v148, %v155
      %v158 = vadd.f32 %v149, %v155
      %159 = vst.msk [vmem:[#allocation8] sm:$0xff] %vm142, %v157
      %160 = vst.msk [vmem:[#allocation8 + $0x8] sm:$0xff] %vm142, %v158
    $region29: #{tpu_custom_call.1} parent=1 // pred_fallthru
      _
    // Predicated region
    $region30: #{tpu_custom_call.1} parent=1 // pred_check
      _
    $region31: #{tpu_custom_call.1} parent=1 // pred_check_branch
      %162 = sbr.rel (0) target = $region33
    $region32: #{tpu_custom_call.1} parent=1 // pred_region
      %s164 = ssub.s32 256, 256
      %165 = vsyncadd [#allocation5], %s164
      %s166 = sshll.u32 [#allocation8], 4
      %s167 = int_to_ptr.vmem [resolvable:$true] %s166
      %172 = dma.vmem_to_hbm [thread:$0]  %s167, 256, %s3, [#allocation5], 128, 128, 8
    $region33: #{tpu_custom_call.1} parent=1 // pred_fallthru
      _
    // Predicated region
    $region34: #{tpu_custom_call.1} parent=1 // pred_check
      _
    $region35: #{tpu_custom_call.1} parent=1 // pred_check_branch
      %174 = sbr.rel (0) target = $region37
    $region36: #{tpu_custom_call.1} parent=1 // pred_region
      %175 = dma.done [#allocation5], 256
    $region37: #{tpu_custom_call.1} parent=1 // pred_fallthru
      _
    %176 = vsyncpa [#allocation4], 1
    %177 = vsyncpa [#allocation7], 1
    %178 = vsyncpa [#allocation5], 1

</llo_original>
